<compile_context>
chip_gen: v6e
topology: v6e:2x2x1
jax: 0.10.0
libtpu: 0.0.40
codegen_flags: <defaults>
</compile_context>

<pallas_src>
import numpy as np
import jax
import jax.numpy as jnp
from jax import lax
from jax.experimental import pallas as pl
from jax.experimental.pallas import tpu as pltpu


def _agent_attn_kernel(x_ref, wqkv_ref, bqkv_ref, pool_ref, o_ref):
    # x_ref/o_ref : (bb, D, L) NCL blocks.
    # wqkv_ref    : (3D, D) fused [Wq; Wk; Wv] (PyTorch (out, in) convention).
    # bqkv_ref    : (3D, 1) fused bias column (always f32).
    # pool_ref    : (A, L) adaptive-average-pool matrix.
    mm_dtype = jnp.bfloat16 if x_ref.dtype == jnp.bfloat16 else jnp.float32

    w = wqkv_ref[...].astype(mm_dtype)       # (3D, D)  (no-op cast in practice)
    b = bqkv_ref[...]                        # (3D, 1)  f32
    pool = pool_ref[...].astype(mm_dtype)    # (A, L)
    D = w.shape[1]
    n_b = x_ref.shape[0]

    std = (((1,), (0,)), ((), ()))    # (M,K) x (K,N)
    rhs_t = (((1,), (1,)), ((), ()))  # (M,K) x (N,K)

    def body(bi, carry):
        x = x_ref[bi].astype(mm_dtype)                                    # (D, L)

        # Fused projections: qkv^T = W_qkv @ x + b  -> (3D, L), f32 accumulation.
        qkv = lax.dot_general(w, x, std, preferred_element_type=jnp.float32) + b
        qT = qkv[0:D]          # (D, L) f32
        kT = qkv[D:2 * D]
        vT = qkv[2 * D:3 * D]
        qT_mm = qT.astype(mm_dtype)
        kT_mm = kT.astype(mm_dtype)
        vT_mm = vT.astype(mm_dtype)

        # Agent tokens: a = pool @ q  -> (A, D)
        a = lax.dot_general(pool, qT_mm, rhs_t, preferred_element_type=jnp.float32)
        a_mm = a.astype(mm_dtype)

        # c = softmax(a @ k^T, -1) @ v, kept transposed as cT (D, A)
        s1 = lax.dot_general(a_mm, kT_mm, std, preferred_element_type=jnp.float32)  # (A, L)
        s1 = s1 - jnp.max(s1, axis=-1, keepdims=True)
        e1 = jnp.exp(s1)
        p1 = e1 * pl.reciprocal(jnp.sum(e1, axis=-1, keepdims=True), approx=True)
        cT = lax.dot_general(vT_mm, p1.astype(mm_dtype), rhs_t,
                             preferred_element_type=jnp.float32)                    # (D, A)

        # r = softmax(q @ a^T, -1) @ c, computed transposed: s2T (A, L)
        s2T = lax.dot_general(a_mm, qT_mm, std, preferred_element_type=jnp.float32)  # (A, L)
        s2T = s2T - jnp.max(s2T, axis=0, keepdims=True)
        e2 = jnp.exp(s2T)
        p2T = e2 * pl.reciprocal(jnp.sum(e2, axis=0, keepdims=True), approx=True)
        rT = lax.dot_general(cT.astype(mm_dtype), p2T.astype(mm_dtype), std,
                             preferred_element_type=jnp.float32)                    # (D, L)

        o_ref[bi] = rT.astype(o_ref.dtype)
        return carry

    lax.fori_loop(0, n_b, body, 0, unroll=(n_b <= 2))


def _adaptive_pool_matrix(L, A, dtype=jnp.float32):
    # Matches torch.nn.AdaptiveAvgPool1d bin boundaries.
    P = np.zeros((A, L), dtype=np.float32)
    for i in range(A):
        start = (i * L) // A
        end = -((-(i + 1) * L) // A)  # ceil((i+1)*L/A)
        P[i, start:end] = 1.0 / (end - start)
    return jnp.asarray(P, dtype=dtype)


def _tpu_vmem_and_cores():
    """Physical VMEM bytes and whether the chip has >1 TensorCore (v7x)."""
    vmem_cap = 64 << 20
    multi_tc = False
    try:
        vmem_cap = int(pltpu.get_tpu_info().vmem_capacity_bytes)
    except Exception:
        pass
    try:
        kind = jax.devices()[0].device_kind.lower()
        multi_tc = "v7" in kind
    except Exception:
        pass
    return vmem_cap, multi_tc


def _pick_batch_block(B, D, L, A, x_itemsize, budget_bytes, multi_tc):
    """Largest divisor of B whose double-buffered I/O blocks + resident weights
    + one iteration of live temporaries fit the VMEM budget. On multi-TC chips
    keep >= 2 grid steps so both TensorCores get work."""
    ws = 2 if x_itemsize == 2 else 4      # matmul-operand element size
    # Resident (double-buffered) weights: W_qkv, bias (lane-padded to 128), pool.
    fixed = 2 * (3 * D * D * ws + 3 * D * 128 * 4 + A * L * ws)
    # One-iteration live temporaries (fori_loop bounds liveness):
    #   f32: qkv (3D,L), rT (D,L), scores/exp (~6 A*L), a/cT (~3 A*D)
    #   mm_dtype: x, qT/kT/vT casts (~4 D*L), p casts (~2 A*L)
    temps = 4 * (4 * D * L + 6 * A * L + 3 * A * D) + ws * (4 * D * L + 2 * A * L)
    # Pipelined I/O per batch: x block + o block, double-buffered each.
    io_per_batch = 2 * 2 * D * L * x_itemsize
    avail = budget_bytes - fixed - temps
    cap = max(1, avail // io_per_batch) if avail > 0 else 1

    best = 1
    for cand in range(1, B + 1):
        if B % cand != 0 or cand > cap:
            continue
        if multi_tc and B > 1 and (B // cand) < 2:
            continue
        best = cand
    return best


def agent_self_attention_1d(x_ncl, wq, bq, wk, bk, wv, bv, agent_size,
                            batch_block=None):
    """x_ncl: (B, dim, L). Linear weights (dim, dim) in PyTorch (out, in)
    convention; biases (dim,). Returns (B, dim, L)."""
    B, D, L = x_ncl.shape
    A = int(agent_size)

    use_bf16 = x_ncl.dtype == jnp.bfloat16
    mm_dtype = jnp.bfloat16 if use_bf16 else jnp.float32

    pool = _adaptive_pool_matrix(L, A, dtype=mm_dtype)               # (A, L)
    # Fused QKV weight/bias (out-features stacked along rows).
    w_qkv = jnp.concatenate([wq, wk, wv], axis=0).astype(mm_dtype)   # (3D, D)
    b_qkv = jnp.concatenate([bq, bk, bv], axis=0)[:, None].astype(jnp.float32)

    vmem_cap, multi_tc = _tpu_vmem_and_cores()
    # ~100 MiB on 128-MiB chips (v5e/v6e), ~48 MiB on 64-MiB chips (v7x).
    vmem_limit = (100 << 20) if vmem_cap >= (96 << 20) else (48 << 20)
    vmem_limit = min(vmem_limit, vmem_cap)

    if batch_block is None:
        bb = _pick_batch_block(B, D, L, A, x_ncl.dtype.itemsize,
                               vmem_limit - (4 << 20), multi_tc)
    else:
        bb = int(batch_block)
    if B % bb != 0:
        raise ValueError(f"batch_block={bb} must divide batch size B={B}")

    grid = (B // bb,)
    full2d = lambda g: (0, 0)

    out = pl.pallas_call(
        _agent_attn_kernel,
        out_shape=jax.ShapeDtypeStruct((B, D, L), x_ncl.dtype),
        grid=grid,
        in_specs=[
            pl.BlockSpec((bb, D, L), lambda g: (g, 0, 0)),      # x (NCL block)
            pl.BlockSpec((3 * D, D), full2d),                   # fused W_qkv
            pl.BlockSpec((3 * D, 1), full2d),                   # fused bias
            pl.BlockSpec((A, L), full2d),                       # pool matrix
        ],
        out_specs=pl.BlockSpec((bb, D, L), lambda g: (g, 0, 0)),
        compiler_params=pltpu.CompilerParams(
            dimension_semantics=("parallel",),
            vmem_limit_bytes=int(vmem_limit),
        ),
    )(x_ncl, w_qkv, b_qkv, pool)
    return out


def _reference(x_ncl, wq, bq, wk, bk, wv, bv, agent_size):
    x = jnp.transpose(x_ncl, (0, 2, 1))
    q = x @ wq.T + bq
    k = x @ wk.T + bk
    v = x @ wv.T + bv
    P = _adaptive_pool_matrix(x.shape[1], agent_size)
    a = jnp.einsum("al,bld->bad", P, q)
    c = jax.nn.softmax(jnp.einsum("bad,bld->bal", a, k), axis=-1) @ v
    r = jax.nn.softmax(jnp.einsum("bld,bad->bla", q, a), axis=-1) @ c
    return jnp.transpose(r, (0, 2, 1))


if __name__ == "__main__":
    B, DIM, L, AGENT = 2, 32, 16, 4

    key = jax.random.PRNGKey(0)
    kx, kq, kbq, kk, kbk, kv, kbv = jax.random.split(key, 7)
    bound = 1.0 / np.sqrt(DIM)

    x = jax.random.normal(kx, (B, DIM, L), dtype=jnp.float32)
    wq = jax.random.uniform(kq, (DIM, DIM), jnp.float32, -bound, bound)
    bq = jax.random.uniform(kbq, (DIM,), jnp.float32, -bound, bound)
    wk = jax.random.uniform(kk, (DIM, DIM), jnp.float32, -bound, bound)
    bk = jax.random.uniform(kbk, (DIM,), jnp.float32, -bound, bound)
    wv = jax.random.uniform(kv, (DIM, DIM), jnp.float32, -bound, bound)
    bv = jax.random.uniform(kbv, (DIM,), jnp.float32, -bound, bound)

    out = agent_self_attention_1d(x, wq, bq, wk, bk, wv, bv, AGENT)
    out = jax.block_until_ready(out)

    ref = _reference(x, wq, bq, wk, bk, wv, bv, AGENT)
    assert out.shape == (B, DIM, L)
    # Tolerance relaxed slightly vs 1e-4 to accommodate the approximate EUP
    # reciprocal in the softmax denominators (fp32 matmul path otherwise).
    np.testing.assert_allclose(np.asarray(out), np.asarray(ref),
                               rtol=2e-3, atol=2e-3)
    print("KERNEL_OK")
</pallas_src>

<mosaic_0001>
module attributes {stable_mosaic.version = 11 : i64} {
  func.func @_agent_attn_kernel(%arg0: i32, %arg1: memref<2x32x16xf32, #tpu.memory_space<vmem>>, %arg2: memref<96x32xf32, #tpu.memory_space<vmem>>, %arg3: memref<96x1xf32, #tpu.memory_space<vmem>>, %arg4: memref<4x16xf32, #tpu.memory_space<vmem>>, %arg5: memref<2x32x16xf32, #tpu.memory_space<vmem>>) attributes {dimension_semantics = [#tpu.dimension_semantics<parallel>], iteration_bounds = array<i64: 1>, scalar_prefetch = 0 : i64, scratch_operands = 0 : i64, tpu.core_type = #tpu.core_type<tc>, window_params = [{transform_indices = @transform_0, window_bounds = array<i64: 2, 32, 16>}, {pipeline_mode = #tpu.pipeline_mode<synchronous>, transform_indices = @transform_1, window_bounds = array<i64: 96, 32>}, {pipeline_mode = #tpu.pipeline_mode<synchronous>, transform_indices = @transform_2, window_bounds = array<i64: 96, 1>}, {pipeline_mode = #tpu.pipeline_mode<synchronous>, transform_indices = @transform_3, window_bounds = array<i64: 4, 16>}, {transform_indices = @transform_4, window_bounds = array<i64: 2, 32, 16>}]} {
    %c0 = arith.constant 0 : index
    %c0_0 = arith.constant 0 : index
    %0 = vector.load %arg2[%c0, %c0_0] : memref<96x32xf32, #tpu.memory_space<vmem>>, vector<96x32xf32>
    %c0_1 = arith.constant 0 : index
    %c0_2 = arith.constant 0 : index
    %1 = vector.load %arg3[%c0_1, %c0_2] : memref<96x1xf32, #tpu.memory_space<vmem>>, vector<96x1xf32>
    %c0_3 = arith.constant 0 : index
    %c0_4 = arith.constant 0 : index
    %2 = vector.load %arg4[%c0_3, %c0_4] : memref<4x16xf32, #tpu.memory_space<vmem>>, vector<4x16xf32>
    %c0_i32 = arith.constant 0 : i32
    %3 = arith.index_cast %c0_i32 : i32 to index
    %c0_5 = arith.constant 0 : index
    %c0_6 = arith.constant 0 : index
    %4 = vector.load %arg1[%3, %c0_5, %c0_6] : memref<2x32x16xf32, #tpu.memory_space<vmem>>, vector<1x32x16xf32>
    %5 = vector.shape_cast %4 : vector<1x32x16xf32> to vector<32x16xf32>
    %cst = arith.constant dense<0.000000e+00> : vector<96x16xf32>
    %6 = tpu.matmul %0, %5, %cst {dimension_numbers = #tpu.dot_dimension_numbers<[1], [0], [0], [1], [0, 0, 1, 1], [], []>} : vector<96x32xf32>, vector<32x16xf32>, vector<96x16xf32> -> vector<96x16xf32>
    %7 = vector.broadcast %1 : vector<96x1xf32> to vector<96x16xf32>
    %8 = arith.addf %6, %7 : vector<96x16xf32>
    %9 = vector.extract_strided_slice %8 {offsets = [0, 0], sizes = [32, 16], strides = [1, 1]} : vector<96x16xf32> to vector<32x16xf32>
    %10 = vector.extract_strided_slice %8 {offsets = [32, 0], sizes = [32, 16], strides = [1, 1]} : vector<96x16xf32> to vector<32x16xf32>
    %11 = vector.extract_strided_slice %8 {offsets = [64, 0], sizes = [32, 16], strides = [1, 1]} : vector<96x16xf32> to vector<32x16xf32>
    %cst_7 = arith.constant dense<0.000000e+00> : vector<4x32xf32>
    %12 = tpu.matmul %2, %9, %cst_7 {dimension_numbers = #tpu.dot_dimension_numbers<[1], [1], [0], [0], [0, 0, 1, 0], [], []>} : vector<4x16xf32>, vector<32x16xf32>, vector<4x32xf32> -> vector<4x32xf32>
    %cst_8 = arith.constant dense<0.000000e+00> : vector<4x16xf32>
    %13 = tpu.matmul %12, %10, %cst_8 {dimension_numbers = #tpu.dot_dimension_numbers<[1], [0], [0], [1], [0, 0, 1, 1], [], []>} : vector<4x32xf32>, vector<32x16xf32>, vector<4x16xf32> -> vector<4x16xf32>
    %cst_9 = arith.constant dense<0xFF800000> : vector<4xf32>
    %14 = vector.multi_reduction <maximumf>, %13, %cst_9 [1] : vector<4x16xf32> to vector<4xf32>
    %15 = vector.shape_cast %14 : vector<4xf32> to vector<4x1xf32>
    %16 = vector.broadcast %15 : vector<4x1xf32> to vector<4x16xf32>
    %17 = arith.subf %13, %16 : vector<4x16xf32>
    %18 = math.exp %17 : vector<4x16xf32>
    %cst_10 = arith.constant dense<0.000000e+00> : vector<4xf32>
    %19 = vector.multi_reduction <add>, %18, %cst_10 [1] : vector<4x16xf32> to vector<4xf32>
    %20 = vector.shape_cast %19 : vector<4xf32> to vector<4x1xf32>
    %21 = tpu.reciprocal %20 {approx = true} : vector<4x1xf32> -> vector<4x1xf32>
    %22 = vector.broadcast %21 : vector<4x1xf32> to vector<4x16xf32>
    %23 = arith.mulf %18, %22 : vector<4x16xf32>
    %cst_11 = arith.constant dense<0.000000e+00> : vector<32x4xf32>
    %24 = tpu.matmul %11, %23, %cst_11 {dimension_numbers = #tpu.dot_dimension_numbers<[1], [1], [0], [0], [0, 0, 1, 0], [], []>} : vector<32x16xf32>, vector<4x16xf32>, vector<32x4xf32> -> vector<32x4xf32>
    %cst_12 = arith.constant dense<0.000000e+00> : vector<4x16xf32>
    %25 = tpu.matmul %12, %9, %cst_12 {dimension_numbers = #tpu.dot_dimension_numbers<[1], [0], [0], [1], [0, 0, 1, 1], [], []>} : vector<4x32xf32>, vector<32x16xf32>, vector<4x16xf32> -> vector<4x16xf32>
    %cst_13 = arith.constant dense<0xFF800000> : vector<16xf32>
    %26 = vector.multi_reduction <maximumf>, %25, %cst_13 [0] : vector<4x16xf32> to vector<16xf32>
    %27 = vector.shape_cast %26 : vector<16xf32> to vector<1x16xf32>
    %28 = vector.broadcast %27 : vector<1x16xf32> to vector<4x16xf32>
    %29 = arith.subf %25, %28 : vector<4x16xf32>
    %30 = math.exp %29 : vector<4x16xf32>
    %cst_14 = arith.constant dense<0.000000e+00> : vector<16xf32>
    %31 = vector.multi_reduction <add>, %30, %cst_14 [0] : vector<4x16xf32> to vector<16xf32>
    %32 = vector.shape_cast %31 : vector<16xf32> to vector<1x16xf32>
    %33 = tpu.reciprocal %32 {approx = true} : vector<1x16xf32> -> vector<1x16xf32>
    %34 = vector.broadcast %33 : vector<1x16xf32> to vector<4x16xf32>
    %35 = arith.mulf %30, %34 : vector<4x16xf32>
    %cst_15 = arith.constant dense<0.000000e+00> : vector<32x16xf32>
    %36 = tpu.matmul %24, %35, %cst_15 {dimension_numbers = #tpu.dot_dimension_numbers<[1], [0], [0], [1], [0, 0, 1, 1], [], []>} : vector<32x4xf32>, vector<4x16xf32>, vector<32x16xf32> -> vector<32x16xf32>
    %37 = arith.index_cast %c0_i32 : i32 to index
    %c0_16 = arith.constant 0 : index
    %c0_17 = arith.constant 0 : index
    %38 = vector.load %arg5[%37, %c0_16, %c0_17] : memref<2x32x16xf32, #tpu.memory_space<vmem>>, vector<1x32x16xf32>
    %39 = vector.shape_cast %38 : vector<1x32x16xf32> to vector<32x16xf32>
    %40 = vector.shape_cast %36 : vector<32x16xf32> to vector<1x32x16xf32>
    tpu.vector_store %arg5[%37, %c0_16, %c0_17], %40 {strides = array<i32>} : memref<2x32x16xf32, #tpu.memory_space<vmem>>, vector<1x32x16xf32>,
    %c1_i32 = arith.constant 1 : i32
    %41 = arith.index_cast %c1_i32 : i32 to index
    %c0_18 = arith.constant 0 : index
    %c0_19 = arith.constant 0 : index
    %42 = vector.load %arg1[%41, %c0_18, %c0_19] : memref<2x32x16xf32, #tpu.memory_space<vmem>>, vector<1x32x16xf32>
    %43 = vector.shape_cast %42 : vector<1x32x16xf32> to vector<32x16xf32>
    %cst_20 = arith.constant dense<0.000000e+00> : vector<96x16xf32>
    %44 = tpu.matmul %0, %43, %cst_20 {dimension_numbers = #tpu.dot_dimension_numbers<[1], [0], [0], [1], [0, 0, 1, 1], [], []>} : vector<96x32xf32>, vector<32x16xf32>, vector<96x16xf32> -> vector<96x16xf32>
    %45 = vector.broadcast %1 : vector<96x1xf32> to vector<96x16xf32>
    %46 = arith.addf %44, %45 : vector<96x16xf32>
    %47 = vector.extract_strided_slice %46 {offsets = [0, 0], sizes = [32, 16], strides = [1, 1]} : vector<96x16xf32> to vector<32x16xf32>
    %48 = vector.extract_strided_slice %46 {offsets = [32, 0], sizes = [32, 16], strides = [1, 1]} : vector<96x16xf32> to vector<32x16xf32>
    %49 = vector.extract_strided_slice %46 {offsets = [64, 0], sizes = [32, 16], strides = [1, 1]} : vector<96x16xf32> to vector<32x16xf32>
    %cst_21 = arith.constant dense<0.000000e+00> : vector<4x32xf32>
    %50 = tpu.matmul %2, %47, %cst_21 {dimension_numbers = #tpu.dot_dimension_numbers<[1], [1], [0], [0], [0, 0, 1, 0], [], []>} : vector<4x16xf32>, vector<32x16xf32>, vector<4x32xf32> -> vector<4x32xf32>
    %cst_22 = arith.constant dense<0.000000e+00> : vector<4x16xf32>
    %51 = tpu.matmul %50, %48, %cst_22 {dimension_numbers = #tpu.dot_dimension_numbers<[1], [0], [0], [1], [0, 0, 1, 1], [], []>} : vector<4x32xf32>, vector<32x16xf32>, vector<4x16xf32> -> vector<4x16xf32>
    %cst_23 = arith.constant dense<0xFF800000> : vector<4xf32>
    %52 = vector.multi_reduction <maximumf>, %51, %cst_23 [1] : vector<4x16xf32> to vector<4xf32>
    %53 = vector.shape_cast %52 : vector<4xf32> to vector<4x1xf32>
    %54 = vector.broadcast %53 : vector<4x1xf32> to vector<4x16xf32>
    %55 = arith.subf %51, %54 : vector<4x16xf32>
    %56 = math.exp %55 : vector<4x16xf32>
    %cst_24 = arith.constant dense<0.000000e+00> : vector<4xf32>
    %57 = vector.multi_reduction <add>, %56, %cst_24 [1] : vector<4x16xf32> to vector<4xf32>
    %58 = vector.shape_cast %57 : vector<4xf32> to vector<4x1xf32>
    %59 = tpu.reciprocal %58 {approx = true} : vector<4x1xf32> -> vector<4x1xf32>
    %60 = vector.broadcast %59 : vector<4x1xf32> to vector<4x16xf32>
    %61 = arith.mulf %56, %60 : vector<4x16xf32>
    %cst_25 = arith.constant dense<0.000000e+00> : vector<32x4xf32>
    %62 = tpu.matmul %49, %61, %cst_25 {dimension_numbers = #tpu.dot_dimension_numbers<[1], [1], [0], [0], [0, 0, 1, 0], [], []>} : vector<32x16xf32>, vector<4x16xf32>, vector<32x4xf32> -> vector<32x4xf32>
    %cst_26 = arith.constant dense<0.000000e+00> : vector<4x16xf32>
    %63 = tpu.matmul %50, %47, %cst_26 {dimension_numbers = #tpu.dot_dimension_numbers<[1], [0], [0], [1], [0, 0, 1, 1], [], []>} : vector<4x32xf32>, vector<32x16xf32>, vector<4x16xf32> -> vector<4x16xf32>
    %cst_27 = arith.constant dense<0xFF800000> : vector<16xf32>
    %64 = vector.multi_reduction <maximumf>, %63, %cst_27 [0] : vector<4x16xf32> to vector<16xf32>
    %65 = vector.shape_cast %64 : vector<16xf32> to vector<1x16xf32>
    %66 = vector.broadcast %65 : vector<1x16xf32> to vector<4x16xf32>
    %67 = arith.subf %63, %66 : vector<4x16xf32>
    %68 = math.exp %67 : vector<4x16xf32>
    %cst_28 = arith.constant dense<0.000000e+00> : vector<16xf32>
    %69 = vector.multi_reduction <add>, %68, %cst_28 [0] : vector<4x16xf32> to vector<16xf32>
    %70 = vector.shape_cast %69 : vector<16xf32> to vector<1x16xf32>
    %71 = tpu.reciprocal %70 {approx = true} : vector<1x16xf32> -> vector<1x16xf32>
    %72 = vector.broadcast %71 : vector<1x16xf32> to vector<4x16xf32>
    %73 = arith.mulf %68, %72 : vector<4x16xf32>
    %cst_29 = arith.constant dense<0.000000e+00> : vector<32x16xf32>
    %74 = tpu.matmul %62, %73, %cst_29 {dimension_numbers = #tpu.dot_dimension_numbers<[1], [0], [0], [1], [0, 0, 1, 1], [], []>} : vector<32x4xf32>, vector<4x16xf32>, vector<32x16xf32> -> vector<32x16xf32>
    %75 = arith.index_cast %c1_i32 : i32 to index
    %c0_30 = arith.constant 0 : index
    %c0_31 = arith.constant 0 : index
    %76 = vector.load %arg5[%75, %c0_30, %c0_31] : memref<2x32x16xf32, #tpu.memory_space<vmem>>, vector<1x32x16xf32>
    %77 = vector.shape_cast %76 : vector<1x32x16xf32> to vector<32x16xf32>
    %78 = vector.shape_cast %74 : vector<32x16xf32> to vector<1x32x16xf32>
    tpu.vector_store %arg5[%75, %c0_30, %c0_31], %78 {strides = array<i32>} : memref<2x32x16xf32, #tpu.memory_space<vmem>>, vector<1x32x16xf32>,
    %c2_i32 = arith.constant 2 : i32
    return
  }
  func.func @transform_0(%arg0: i32) -> (i32, i32, i32) {
    %c0_i32 = arith.constant 0 : i32
    %c0_i32_0 = arith.constant 0 : i32
    %c0_i32_1 = arith.constant 0 : i32
    return %arg0, %c0_i32, %c0_i32_0 : i32, i32, i32
  }
  func.func @transform_1(%arg0: i32) -> (i32, i32) {
    %c0_i32 = arith.constant 0 : i32
    %c0_i32_0 = arith.constant 0 : i32
    %c0_i32_1 = arith.constant 0 : i32
    return %c0_i32, %c0_i32_0 : i32, i32
  }
  func.func @transform_2(%arg0: i32) -> (i32, i32) {
    %c0_i32 = arith.constant 0 : i32
    %c0_i32_0 = arith.constant 0 : i32
    %c0_i32_1 = arith.constant 0 : i32
    return %c0_i32, %c0_i32_0 : i32, i32
  }
  func.func @transform_3(%arg0: i32) -> (i32, i32) {
    %c0_i32 = arith.constant 0 : i32
    %c0_i32_0 = arith.constant 0 : i32
    %c0_i32_1 = arith.constant 0 : i32
    return %c0_i32, %c0_i32_0 : i32, i32
  }
  func.func @transform_4(%arg0: i32) -> (i32, i32, i32) {
    %c0_i32 = arith.constant 0 : i32
    %c0_i32_0 = arith.constant 0 : i32
    %c0_i32_1 = arith.constant 0 : i32
    return %arg0, %c0_i32, %c0_i32_0 : i32, i32, i32
  }
}

</mosaic_0001>

<llo_original>
// kernel: tpu_custom_call.1
$region0: #{tpu_custom_call.1}
  #allocation0 [shape = 'u32[]', space=smem, size = 0x4, offset = 0x4, fixed_abs, tag = 'smem constant byte address 0x4 - core index']
  #allocation1 [shape = 'u32[144,128]{1,0:T(1,128)}', space=vmem, size = 0x12000, scoped, tag = 'internal scratch']
  %s0 = inlined_call_operand.vmem [shape: f32[2,32,16], index: 0, kind: input, shape index: {}]
  %s1 = inlined_call_operand.vmem [shape: f32[96,32], index: 1, kind: input, shape index: {}]
  %s2 = inlined_call_operand.vmem [shape: f32[96,1], index: 2, kind: input, shape index: {}]
  %s3 = inlined_call_operand.vmem [shape: f32[4,16], index: 3, kind: input, shape index: {}]
  %s4 = inlined_call_operand.vmem [shape: f32[2,32,16], index: 4, kind: output, shape index: {}]
  %s5 = sld [smem:[#allocation0]]
  $region26: #{tpu_custom_call.1} parent=0
    _
  %s7 = ssub.s32 1, %s5
  %s8 = scalar_select 0, %s7, %s5
  // Predicated region
  $region2: #{tpu_custom_call.1} parent=0 // pred_check
    _
  $region3: #{tpu_custom_call.1} parent=0 // pred_check_branch
    %10 = sbr.rel (0) target = $region5
  $region4: #{tpu_custom_call.1} parent=0 // pred_region
    _
  $region5: #{tpu_custom_call.1} parent=0 // pred_fallthru
    _
  // Predicated region
  $region6: #{tpu_custom_call.1} parent=0 // pred_check
    _
  $region7: #{tpu_custom_call.1} parent=0 // pred_check_branch
    %12 = sbr.rel (0) target = $region9
  $region8: #{tpu_custom_call.1} parent=0 // pred_region
    _
  $region9: #{tpu_custom_call.1} parent=0 // pred_fallthru
    _
  // Predicated region
  $region10: #{tpu_custom_call.1} parent=0 // pred_check
    _
  $region11: #{tpu_custom_call.1} parent=0 // pred_check_branch
    %14 = sbr.rel (0) target = $region13
  $region12: #{tpu_custom_call.1} parent=0 // pred_region
    _
  $region13: #{tpu_custom_call.1} parent=0 // pred_fallthru
    _
  // Predicated region
  $region14: #{tpu_custom_call.1} parent=0 // pred_check
    _
  $region15: #{tpu_custom_call.1} parent=0 // pred_check_branch
    %16 = sbr.rel (0) target = $region17
  $region16: #{tpu_custom_call.1} parent=0 // pred_region
    _
  $region17: #{tpu_custom_call.1} parent=0 // pred_fallthru
    _
  %v17 = vld [vmem:[%s1] sm:$0xff]
  %v18 = vld [vmem:[%s1 + $0x8] sm:$0xff]
  %v19 = vld [vmem:[%s1 + $0x10] sm:$0xff]
  %v20 = vld [vmem:[%s1 + $0x18] sm:$0xff]
  %v21 = vld [vmem:[%s1 + $0x20] sm:$0xff]
  %v22 = vld [vmem:[%s1 + $0x28] sm:$0xff]
  %v23 = vld [vmem:[%s1 + $0x30] sm:$0xff]
  %v24 = vld [vmem:[%s1 + $0x38] sm:$0xff]
  %v25 = vld [vmem:[%s1 + $0x40] sm:$0xff]
  %v26 = vld [vmem:[%s1 + $0x48] sm:$0xff]
  %v27 = vld [vmem:[%s1 + $0x50] sm:$0xff]
  %v28 = vld [vmem:[%s1 + $0x58] sm:$0xff]
  %v29 = vld [vmem:[%s2] sm:$0xff]
  %v30 = vld [vmem:[%s2 + $0x8] sm:$0xff]
  %v31 = vld [vmem:[%s2 + $0x10] sm:$0xff]
  %v32 = vld [vmem:[%s2 + $0x18] sm:$0xff]
  %v33 = vld [vmem:[%s2 + $0x20] sm:$0xff]
  %v34 = vld [vmem:[%s2 + $0x28] sm:$0xff]
  %v35 = vld [vmem:[%s2 + $0x30] sm:$0xff]
  %v36 = vld [vmem:[%s2 + $0x38] sm:$0xff]
  %v37 = vld [vmem:[%s2 + $0x40] sm:$0xff]
  %v38 = vld [vmem:[%s2 + $0x48] sm:$0xff]
  %v39 = vld [vmem:[%s2 + $0x50] sm:$0xff]
  %v40 = vld [vmem:[%s2 + $0x58] sm:$0xff]
  %v41 = vld [vmem:[%s3] sm:$0xf]
  %v42 = vld [vmem:[%s0] sm:$0xff]
  %v43 = vld [vmem:[%s0 + $0x8] sm:$0xff]
  %v44 = vld [vmem:[%s0 + $0x10] sm:$0xff]
  %v45 = vld [vmem:[%s0 + $0x18] sm:$0xff]
  %47 = vset.pattern.permute.xlu0 0
  %48 = vperm.xlu0 %47, %v29
  %v49 = vpop.permute.xlu0 %48
  %52 = vset.pattern.permute.xlu0 0
  %53 = vperm.xlu0 %52, %v30
  %v54 = vpop.permute.xlu0 %53
  %57 = vset.pattern.permute.xlu0 0
  %58 = vperm.xlu0 %57, %v31
  %v59 = vpop.permute.xlu0 %58
  %62 = vset.pattern.permute.xlu0 0
  %63 = vperm.xlu0 %62, %v32
  %v64 = vpop.permute.xlu0 %63
  %67 = vset.pattern.permute.xlu0 0
  %68 = vperm.xlu0 %67, %v33
  %v69 = vpop.permute.xlu0 %68
  %72 = vset.pattern.permute.xlu0 0
  %73 = vperm.xlu0 %72, %v34
  %v74 = vpop.permute.xlu0 %73
  %77 = vset.pattern.permute.xlu0 0
  %78 = vperm.xlu0 %77, %v35
  %v79 = vpop.permute.xlu0 %78
  %82 = vset.pattern.permute.xlu0 0
  %83 = vperm.xlu0 %82, %v36
  %v84 = vpop.permute.xlu0 %83
  %87 = vset.pattern.permute.xlu0 0
  %88 = vperm.xlu0 %87, %v37
  %v89 = vpop.permute.xlu0 %88
  %92 = vset.pattern.permute.xlu0 0
  %93 = vperm.xlu0 %92, %v38
  %v94 = vpop.permute.xlu0 %93
  %97 = vset.pattern.permute.xlu0 0
  %98 = vperm.xlu0 %97, %v39
  %v99 = vpop.permute.xlu0 %98
  %102 = vset.pattern.permute.xlu0 0
  %103 = vperm.xlu0 %102, %v40
  %v104 = vpop.permute.xlu0 %103
  %vm106 = vcmask 261120
  %v108 = vsel %vm106, %v17, 0
  %v111 = vsel %vm106, %v18, 0
  %v114 = vsel %vm106, %v19, 0
  %v117 = vsel %vm106, %v20, 0
  %v120 = vsel %vm106, %v21, 0
  %v123 = vsel %vm106, %v22, 0
  %v126 = vsel %vm106, %v23, 0
  %v129 = vsel %vm106, %v24, 0
  %v132 = vsel %vm106, %v25, 0
  %v135 = vsel %vm106, %v26, 0
  %v138 = vsel %vm106, %v27, 0
  %v141 = vsel %vm106, %v28, 0
  %143 = vmatprep.subr.mxu0 0.0
  %144 = vmatpush1.msra.mxu0 0.0
  %145 = vmatprep.subr.mxu0 0.0
  %146 = vmatpush1.msra.mxu0 0.0
  %147 = vmatprep.subr.mxu0 0.0
  %148 = vmatpush1.msra.mxu0 0.0
  %149 = vmatprep.subr.mxu0 0.0
  %150 = vmatpush1.msra.mxu0 0.0
  %151 = vmatprep.subr.mxu0 0.0
  %152 = vmatpush1.msra.mxu0 0.0
  %153 = vmatprep.subr.mxu0 0.0
  %154 = vmatpush1.msra.mxu0 0.0
  %155 = vmatprep.subr.mxu0 0.0
  %156 = vmatpush1.msra.mxu0 0.0
  %157 = vmatprep.subr.mxu0 0.0
  %158 = vmatpush1.msra.mxu0 0.0
  %159 = vmatprep.subr.mxu0 0.0
  %160 = vmatpush1.msra.mxu0 0.0
  %161 = vmatprep.subr.mxu0 0.0
  %162 = vmatpush1.msra.mxu0 0.0
  %163 = vmatprep.subr.mxu0 0.0
  %164 = vmatpush1.msra.mxu0 0.0
  %165 = vmatprep.subr.mxu0 0.0
  %166 = vmatpush1.msra.mxu0 0.0
  %167 = vmatprep.subr.mxu0 0.0
  %168 = vmatpush1.msra.mxu0 %v45
  %169 = vmatprep.subr.mxu0 0.0
  %170 = vmatpush1.msra.mxu0 %v44
  %171 = vmatprep.subr.mxu0 0.0
  %172 = vmatpush1.msra.mxu0 %v43
  %173 = vmatprep.subr.mxu0 0.0
  %174 = vmatpush1.msra.mxu0 %v42
  %175 = vmatprep.subr.mxu0 0.0
  %176 = vmatpush2.msra.mxu0 0.0
  %177 = vmatprep.subr.mxu0 0.0
  %178 = vmatpush2.msra.mxu0 0.0
  %179 = vmatprep.subr.mxu0 0.0
  %180 = vmatpush2.msra.mxu0 0.0
  %181 = vmatprep.subr.mxu0 0.0
  %182 = vmatpush2.msra.mxu0 0.0
  %183 = vmatprep.subr.mxu0 0.0
  %184 = vmatpush2.msra.mxu0 0.0
  %185 = vmatprep.subr.mxu0 0.0
  %186 = vmatpush2.msra.mxu0 0.0
  %187 = vmatprep.subr.mxu0 0.0
  %188 = vmatpush2.msra.mxu0 0.0
  %189 = vmatprep.subr.mxu0 0.0
  %190 = vmatpush2.msra.mxu0 0.0
  %191 = vmatprep.subr.mxu0 0.0
  %192 = vmatpush2.msra.mxu0 0.0
  %193 = vmatprep.subr.mxu0 0.0
  %194 = vmatpush2.msra.mxu0 0.0
  %195 = vmatprep.subr.mxu0 0.0
  %196 = vmatpush2.msra.mxu0 0.0
  %197 = vmatprep.subr.mxu0 0.0
  %198 = vmatpush2.msra.mxu0 0.0
  %199 = vmatprep.subr.mxu0 0.0
  %200 = vmatpush2.msra.mxu0 0.0
  %201 = vmatprep.subr.mxu0 0.0
  %202 = vmatpush2.msra.mxu0 0.0
  %203 = vmatprep.subr.mxu0 0.0
  %204 = vmatpush2.msra.mxu0 0.0
  %205 = vmatprep.subr.mxu0 0.0
  %206 = vmatpush2.msra.mxu0 0.0
  %207 = vmatprep.mubr.f32.mxu0 0.0
  %208 = vmatmul.mubr.f32.gmra.mxu0 %v108
  %v209 = vpop.f32.mrf.mxu0
  %v210 = vadd.f32 %v49, %v209
  %v211 = vpop.f32.mrf.mxu0
  %212 = vmatprep.mubr.f32.mxu0 0.0
  %213 = vmatmul.mubr.f32.gmra.mxu0 %v111
  %v214 = vpop.f32.mrf.mxu0
  %v215 = vadd.f32 %v54, %v214
  %v216 = vpop.f32.mrf.mxu0
  %217 = vmatprep.mubr.f32.mxu0 0.0
  %218 = vmatmul.mubr.f32.gmra.mxu0 %v114
  %v219 = vpop.f32.mrf.mxu0
  %v220 = vadd.f32 %v59, %v219
  %v221 = vpop.f32.mrf.mxu0
  %222 = vmatprep.mubr.f32.mxu0 0.0
  %223 = vmatmul.mubr.f32.gmra.mxu0 %v117
  %v224 = vpop.f32.mrf.mxu0
  %v225 = vadd.f32 %v64, %v224
  %v226 = vpop.f32.mrf.mxu0
  %227 = vmatprep.mubr.f32.mxu0 0.0
  %228 = vmatmul.mubr.f32.gmra.mxu0 %v120
  %v229 = vpop.f32.mrf.mxu0
  %v230 = vadd.f32 %v69, %v229
  %v231 = vpop.f32.mrf.mxu0
  %232 = vmatprep.mubr.f32.mxu0 0.0
  %233 = vmatmul.mubr.f32.gmra.mxu0 %v123
  %v234 = vpop.f32.mrf.mxu0
  %v235 = vadd.f32 %v74, %v234
  %v236 = vpop.f32.mrf.mxu0
  %237 = vmatprep.mubr.f32.mxu0 0.0
  %238 = vmatmul.mubr.f32.gmra.mxu0 %v126
  %v239 = vpop.f32.mrf.mxu0
  %v240 = vadd.f32 %v79, %v239
  %v241 = vpop.f32.mrf.mxu0
  %242 = vmatprep.mubr.f32.mxu0 0.0
  %243 = vmatmul.mubr.f32.gmra.mxu0 %v129
  %v244 = vpop.f32.mrf.mxu0
  %v245 = vadd.f32 %v84, %v244
  %v246 = vpop.f32.mrf.mxu0
  %247 = vmatprep.mubr.f32.mxu0 0.0
  %248 = vmatmul.mubr.f32.gmra.mxu0 %v132
  %v249 = vpop.f32.mrf.mxu0
  %v250 = vadd.f32 %v89, %v249
  %v251 = vpop.f32.mrf.mxu0
  %252 = vmatprep.mubr.f32.mxu0 0.0
  %253 = vmatmul.mubr.f32.gmra.mxu0 %v135
  %v254 = vpop.f32.mrf.mxu0
  %v255 = vadd.f32 %v94, %v254
  %v256 = vpop.f32.mrf.mxu0
  %257 = vmatprep.mubr.f32.mxu0 0.0
  %258 = vmatmul.mubr.f32.gmra.mxu0 %v138
  %v259 = vpop.f32.mrf.mxu0
  %v260 = vadd.f32 %v99, %v259
  %v261 = vpop.f32.mrf.mxu0
  %262 = vmatprep.mubr.f32.mxu0 0.0
  %263 = vmatmul.mubr.f32.gmra.mxu0 %v141
  %v264 = vpop.f32.mrf.mxu0
  %v265 = vadd.f32 %v104, %v264
  %v266 = vpop.f32.mrf.mxu0
  %267 = vdwg.mxu0
  %vm268 = vcmask 130048
  %v270 = vsel %vm268, %v41, 0
  %v273 = vsel %vm268, %v210, 0
  %v276 = vsel %vm268, %v215, 0
  %v279 = vsel %vm268, %v220, 0
  %v282 = vsel %vm268, %v225, 0
  %284 = vmatprep.subr.mxu0 0.0
  %285 = vmatpush1.xpose.msra.mxu0 0.0
  %286 = vmatprep.subr.mxu0 0.0
  %287 = vmatpush1.xpose.msra.mxu0 0.0
  %288 = vmatprep.subr.mxu0 0.0
  %289 = vmatpush1.xpose.msra.mxu0 0.0
  %290 = vmatprep.subr.mxu0 0.0
  %291 = vmatpush1.xpose.msra.mxu0 0.0
  %292 = vmatprep.subr.mxu0 0.0
  %293 = vmatpush1.xpose.msra.mxu0 0.0
  %294 = vmatprep.subr.mxu0 0.0
  %295 = vmatpush1.xpose.msra.mxu0 0.0
  %296 = vmatprep.subr.mxu0 0.0
  %297 = vmatpush1.xpose.msra.mxu0 0.0
  %298 = vmatprep.subr.mxu0 0.0
  %299 = vmatpush1.xpose.msra.mxu0 0.0
  %300 = vmatprep.subr.mxu0 0.0
  %301 = vmatpush1.xpose.msra.mxu0 0.0
  %302 = vmatprep.subr.mxu0 0.0
  %303 = vmatpush1.xpose.msra.mxu0 0.0
  %304 = vmatprep.subr.mxu0 0.0
  %305 = vmatpush1.xpose.msra.mxu0 0.0
  %306 = vmatprep.subr.mxu0 0.0
  %307 = vmatpush1.xpose.msra.mxu0 0.0
  %308 = vmatprep.subr.mxu0 0.0
  %309 = vmatpush1.xpose.msra.mxu0 %v282
  %310 = vmatprep.subr.mxu0 0.0
  %311 = vmatpush1.xpose.msra.mxu0 %v279
  %312 = vmatprep.subr.mxu0 0.0
  %313 = vmatpush1.xpose.msra.mxu0 %v276
  %314 = vmatprep.subr.mxu0 0.0
  %315 = vmatpush1.xpose.msra.mxu0 %v273
  %316 = vmatprep.subr.mxu0 0.0
  %317 = vmatpush2.xpose.msra.mxu0 0.0
  %318 = vmatprep.subr.mxu0 0.0
  %319 = vmatpush2.xpose.msra.mxu0 0.0
  %320 = vmatprep.subr.mxu0 0.0
  %321 = vmatpush2.xpose.msra.mxu0 0.0
  %322 = vmatprep.subr.mxu0 0.0
  %323 = vmatpush2.xpose.msra.mxu0 0.0
  %324 = vmatprep.subr.mxu0 0.0
  %325 = vmatpush2.xpose.msra.mxu0 0.0
  %326 = vmatprep.subr.mxu0 0.0
  %327 = vmatpush2.xpose.msra.mxu0 0.0
  %328 = vmatprep.subr.mxu0 0.0
  %329 = vmatpush2.xpose.msra.mxu0 0.0
  %330 = vmatprep.subr.mxu0 0.0
  %331 = vmatpush2.xpose.msra.mxu0 0.0
  %332 = vmatprep.subr.mxu0 0.0
  %333 = vmatpush2.xpose.msra.mxu0 0.0
  %334 = vmatprep.subr.mxu0 0.0
  %335 = vmatpush2.xpose.msra.mxu0 0.0
  %336 = vmatprep.subr.mxu0 0.0
  %337 = vmatpush2.xpose.msra.mxu0 0.0
  %338 = vmatprep.subr.mxu0 0.0
  %339 = vmatpush2.xpose.msra.mxu0 0.0
  %340 = vmatprep.subr.mxu0 0.0
  %341 = vmatpush2.xpose.msra.mxu0 0.0
  %342 = vmatprep.subr.mxu0 0.0
  %343 = vmatpush2.xpose.msra.mxu0 0.0
  %344 = vmatprep.subr.mxu0 0.0
  %345 = vmatpush2.xpose.msra.mxu0 0.0
  %346 = vmatprep.subr.mxu0 0.0
  %347 = vmatpush2.xpose.msra.mxu0 0.0
  %348 = vmatprep.mubr.f32.mxu0 0.0
  %349 = vmatmul.mubr.f32.gmra.mxu0 %v270
  %v350 = vpop.f32.mrf.mxu0
  %v351 = vadd.f32 0.0, %v350
  %v352 = vpop.f32.mrf.mxu0
  %353 = vdwg.mxu0
  %v355 = vsel %vm106, %v351, 0
  %357 = vmatprep.subr.mxu0 0.0
  %358 = vmatpush1.msra.mxu0 0.0
  %359 = vmatprep.subr.mxu0 0.0
  %360 = vmatpush1.msra.mxu0 0.0
  %361 = vmatprep.subr.mxu0 0.0
  %362 = vmatpush1.msra.mxu0 0.0
  %363 = vmatprep.subr.mxu0 0.0
  %364 = vmatpush1.msra.mxu0 0.0
  %365 = vmatprep.subr.mxu0 0.0
  %366 = vmatpush1.msra.mxu0 0.0
  %367 = vmatprep.subr.mxu0 0.0
  %368 = vmatpush1.msra.mxu0 0.0
  %369 = vmatprep.subr.mxu0 0.0
  %370 = vmatpush1.msra.mxu0 0.0
  %371 = vmatprep.subr.mxu0 0.0
  %372 = vmatpush1.msra.mxu0 0.0
  %373 = vmatprep.subr.mxu0 0.0
  %374 = vmatpush1.msra.mxu0 0.0
  %375 = vmatprep.subr.mxu0 0.0
  %376 = vmatpush1.msra.mxu0 0.0
  %377 = vmatprep.subr.mxu0 0.0
  %378 = vmatpush1.msra.mxu0 0.0
  %379 = vmatprep.subr.mxu0 0.0
  %380 = vmatpush1.msra.mxu0 0.0
  %381 = vmatprep.subr.mxu0 0.0
  %382 = vmatpush1.msra.mxu0 %v245
  %383 = vmatprep.subr.mxu0 0.0
  %384 = vmatpush1.msra.mxu0 %v240
  %385 = vmatprep.subr.mxu0 0.0
  %386 = vmatpush1.msra.mxu0 %v235
  %387 = vmatprep.subr.mxu0 0.0
  %388 = vmatpush1.msra.mxu0 %v230
  %389 = vmatprep.subr.mxu0 0.0
  %390 = vmatpush2.msra.mxu0 0.0
  %391 = vmatprep.subr.mxu0 0.0
  %392 = vmatpush2.msra.mxu0 0.0
  %393 = vmatprep.subr.mxu0 0.0
  %394 = vmatpush2.msra.mxu0 0.0
  %395 = vmatprep.subr.mxu0 0.0
  %396 = vmatpush2.msra.mxu0 0.0
  %397 = vmatprep.subr.mxu0 0.0
  %398 = vmatpush2.msra.mxu0 0.0
  %399 = vmatprep.subr.mxu0 0.0
  %400 = vmatpush2.msra.mxu0 0.0
  %401 = vmatprep.subr.mxu0 0.0
  %402 = vmatpush2.msra.mxu0 0.0
  %403 = vmatprep.subr.mxu0 0.0
  %404 = vmatpush2.msra.mxu0 0.0
  %405 = vmatprep.subr.mxu0 0.0
  %406 = vmatpush2.msra.mxu0 0.0
  %407 = vmatprep.subr.mxu0 0.0
  %408 = vmatpush2.msra.mxu0 0.0
  %409 = vmatprep.subr.mxu0 0.0
  %410 = vmatpush2.msra.mxu0 0.0
  %411 = vmatprep.subr.mxu0 0.0
  %412 = vmatpush2.msra.mxu0 0.0
  %413 = vmatprep.subr.mxu0 0.0
  %414 = vmatpush2.msra.mxu0 0.0
  %415 = vmatprep.subr.mxu0 0.0
  %416 = vmatpush2.msra.mxu0 0.0
  %417 = vmatprep.subr.mxu0 0.0
  %418 = vmatpush2.msra.mxu0 0.0
  %419 = vmatprep.subr.mxu0 0.0
  %420 = vmatpush2.msra.mxu0 0.0
  %421 = vmatprep.mubr.f32.mxu0 0.0
  %422 = vmatmul.mubr.f32.gmra.mxu0 %v355
  %v423 = vpop.f32.mrf.mxu0
  %v424 = vadd.f32 0.0, %v423
  %v425 = vpop.f32.mrf.mxu0
  %426 = vdwg.mxu0
  %vm427 = vcmask 125952
  %v428 = vsel %vm427, %v424, -inf
  %429 = vmax.xlane.f32.xlu0 %v428
  %v430 = vpop.xlane.xlu0 %429
  %v431 = vsub.f32 %v424, %v430
  %v432 = vmul.f32 %v431, 1.442695
  %v433 = vpow.pop %v432
  %v434 = vsel %vm427, %v433, 0.0
  %435 = vadd.xlane.f32.xlu0 %v434
  %v436 = vpop.xlane.xlu0 %435
  %v437 = vrcp.pop %v436
  %v438 = vmul.f32 %v433, %v437
  %v440 = vsel %vm268, %v250, 0
  %v443 = vsel %vm268, %v255, 0
  %v446 = vsel %vm268, %v260, 0
  %v449 = vsel %vm268, %v265, 0
  %v452 = vsel %vm268, %v438, 0
  %454 = vmatprep.subr.mxu0 0.0
  %455 = vmatpush1.xpose.msra.mxu0 0.0
  %456 = vmatprep.subr.mxu0 0.0
  %457 = vmatpush1.xpose.msra.mxu0 0.0
  %458 = vmatprep.subr.mxu0 0.0
  %459 = vmatpush1.xpose.msra.mxu0 0.0
  %460 = vmatprep.subr.mxu0 0.0
  %461 = vmatpush1.xpose.msra.mxu0 0.0
  %462 = vmatprep.subr.mxu0 0.0
  %463 = vmatpush1.xpose.msra.mxu0 0.0
  %464 = vmatprep.subr.mxu0 0.0
  %465 = vmatpush1.xpose.msra.mxu0 0.0
  %466 = vmatprep.subr.mxu0 0.0
  %467 = vmatpush1.xpose.msra.mxu0 0.0
  %468 = vmatprep.subr.mxu0 0.0
  %469 = vmatpush1.xpose.msra.mxu0 0.0
  %470 = vmatprep.subr.mxu0 0.0
  %471 = vmatpush1.xpose.msra.mxu0 0.0
  %472 = vmatprep.subr.mxu0 0.0
  %473 = vmatpush1.xpose.msra.mxu0 0.0
  %474 = vmatprep.subr.mxu0 0.0
  %475 = vmatpush1.xpose.msra.mxu0 0.0
  %476 = vmatprep.subr.mxu0 0.0
  %477 = vmatpush1.xpose.msra.mxu0 0.0
  %478 = vmatprep.subr.mxu0 0.0
  %479 = vmatpush1.xpose.msra.mxu0 0.0
  %480 = vmatprep.subr.mxu0 0.0
  %481 = vmatpush1.xpose.msra.mxu0 0.0
  %482 = vmatprep.subr.mxu0 0.0
  %483 = vmatpush1.xpose.msra.mxu0 0.0
  %484 = vmatprep.subr.mxu0 0.0
  %485 = vmatpush1.xpose.msra.mxu0 %v452
  %486 = vmatprep.subr.mxu0 0.0
  %487 = vmatpush2.xpose.msra.mxu0 0.0
  %488 = vmatprep.subr.mxu0 0.0
  %489 = vmatpush2.xpose.msra.mxu0 0.0
  %490 = vmatprep.subr.mxu0 0.0
  %491 = vmatpush2.xpose.msra.mxu0 0.0
  %492 = vmatprep.subr.mxu0 0.0
  %493 = vmatpush2.xpose.msra.mxu0 0.0
  %494 = vmatprep.subr.mxu0 0.0
  %495 = vmatpush2.xpose.msra.mxu0 0.0
  %496 = vmatprep.subr.mxu0 0.0
  %497 = vmatpush2.xpose.msra.mxu0 0.0
  %498 = vmatprep.subr.mxu0 0.0
  %499 = vmatpush2.xpose.msra.mxu0 0.0
  %500 = vmatprep.subr.mxu0 0.0
  %501 = vmatpush2.xpose.msra.mxu0 0.0
  %502 = vmatprep.subr.mxu0 0.0
  %503 = vmatpush2.xpose.msra.mxu0 0.0
  %504 = vmatprep.subr.mxu0 0.0
  %505 = vmatpush2.xpose.msra.mxu0 0.0
  %506 = vmatprep.subr.mxu0 0.0
  %507 = vmatpush2.xpose.msra.mxu0 0.0
  %508 = vmatprep.subr.mxu0 0.0
  %509 = vmatpush2.xpose.msra.mxu0 0.0
  %510 = vmatprep.subr.mxu0 0.0
  %511 = vmatpush2.xpose.msra.mxu0 0.0
  %512 = vmatprep.subr.mxu0 0.0
  %513 = vmatpush2.xpose.msra.mxu0 0.0
  %514 = vmatprep.subr.mxu0 0.0
  %515 = vmatpush2.xpose.msra.mxu0 0.0
  %516 = vmatprep.subr.mxu0 0.0
  %517 = vmatpush2.xpose.msra.mxu0 0.0
  %518 = vmatprep.mubr.f32.mxu0 0.0
  %519 = vmatmul.mubr.f32.gmra.mxu0 %v440
  %v520 = vpop.f32.mrf.mxu0
  %v521 = vadd.f32 0.0, %v520
  %v522 = vpop.f32.mrf.mxu0
  %523 = vmatprep.mubr.f32.mxu0 0.0
  %524 = vmatmul.mubr.f32.gmra.mxu0 %v443
  %v525 = vpop.f32.mrf.mxu0
  %v526 = vadd.f32 0.0, %v525
  %v527 = vpop.f32.mrf.mxu0
  %528 = vmatprep.mubr.f32.mxu0 0.0
  %529 = vmatmul.mubr.f32.gmra.mxu0 %v446
  %v530 = vpop.f32.mrf.mxu0
  %v531 = vadd.f32 0.0, %v530
  %v532 = vpop.f32.mrf.mxu0
  %533 = vmatprep.mubr.f32.mxu0 0.0
  %534 = vmatmul.mubr.f32.gmra.mxu0 %v449
  %v535 = vpop.f32.mrf.mxu0
  %v536 = vadd.f32 0.0, %v535
  %v537 = vpop.f32.mrf.mxu0
  %538 = vdwg.mxu0
  %539 = vmatprep.subr.mxu0 0.0
  %540 = vmatpush1.msra.mxu0 0.0
  %541 = vmatprep.subr.mxu0 0.0
  %542 = vmatpush1.msra.mxu0 0.0
  %543 = vmatprep.subr.mxu0 0.0
  %544 = vmatpush1.msra.mxu0 0.0
  %545 = vmatprep.subr.mxu0 0.0
  %546 = vmatpush1.msra.mxu0 0.0
  %547 = vmatprep.subr.mxu0 0.0
  %548 = vmatpush1.msra.mxu0 0.0
  %549 = vmatprep.subr.mxu0 0.0
  %550 = vmatpush1.msra.mxu0 0.0
  %551 = vmatprep.subr.mxu0 0.0
  %552 = vmatpush1.msra.mxu0 0.0
  %553 = vmatprep.subr.mxu0 0.0
  %554 = vmatpush1.msra.mxu0 0.0
  %555 = vmatprep.subr.mxu0 0.0
  %556 = vmatpush1.msra.mxu0 0.0
  %557 = vmatprep.subr.mxu0 0.0
  %558 = vmatpush1.msra.mxu0 0.0
  %559 = vmatprep.subr.mxu0 0.0
  %560 = vmatpush1.msra.mxu0 0.0
  %561 = vmatprep.subr.mxu0 0.0
  %562 = vmatpush1.msra.mxu0 0.0
  %563 = vmatprep.subr.mxu0 0.0
  %564 = vmatpush1.msra.mxu0 %v225
  %565 = vmatprep.subr.mxu0 0.0
  %566 = vmatpush1.msra.mxu0 %v220
  %567 = vmatprep.subr.mxu0 0.0
  %568 = vmatpush1.msra.mxu0 %v215
  %569 = vmatprep.subr.mxu0 0.0
  %570 = vmatpush1.msra.mxu0 %v210
  %571 = vmatprep.subr.mxu0 0.0
  %572 = vmatpush2.msra.mxu0 0.0
  %573 = vmatprep.subr.mxu0 0.0
  %574 = vmatpush2.msra.mxu0 0.0
  %575 = vmatprep.subr.mxu0 0.0
  %576 = vmatpush2.msra.mxu0 0.0
  %577 = vmatprep.subr.mxu0 0.0
  %578 = vmatpush2.msra.mxu0 0.0
  %579 = vmatprep.subr.mxu0 0.0
  %580 = vmatpush2.msra.mxu0 0.0
  %581 = vmatprep.subr.mxu0 0.0
  %582 = vmatpush2.msra.mxu0 0.0
  %583 = vmatprep.subr.mxu0 0.0
  %584 = vmatpush2.msra.mxu0 0.0
  %585 = vmatprep.subr.mxu0 0.0
  %586 = vmatpush2.msra.mxu0 0.0
  %587 = vmatprep.subr.mxu0 0.0
  %588 = vmatpush2.msra.mxu0 0.0
  %589 = vmatprep.subr.mxu0 0.0
  %590 = vmatpush2.msra.mxu0 0.0
  %591 = vmatprep.subr.mxu0 0.0
  %592 = vmatpush2.msra.mxu0 0.0
  %593 = vmatprep.subr.mxu0 0.0
  %594 = vmatpush2.msra.mxu0 0.0
  %595 = vmatprep.subr.mxu0 0.0
  %596 = vmatpush2.msra.mxu0 0.0
  %597 = vmatprep.subr.mxu0 0.0
  %598 = vmatpush2.msra.mxu0 0.0
  %599 = vmatprep.subr.mxu0 0.0
  %600 = vmatpush2.msra.mxu0 0.0
  %601 = vmatprep.subr.mxu0 0.0
  %602 = vmatpush2.msra.mxu0 0.0
  %603 = vmatprep.mubr.f32.mxu0 0.0
  %604 = vmatmul.mubr.f32.gmra.mxu0 %v355
  %v605 = vpop.f32.mrf.mxu0
  %v606 = vadd.f32 0.0, %v605
  %v607 = vpop.f32.mrf.mxu0
  %608 = vdwg.mxu0
  %v609 = vsel %vm427, %v606, -inf
  %v610 = vrot.slane %v609, 4
  %v611 = vmax.f32 %v609, %v610
  %v612 = vrot.slane %v611, 2
  %v613 = vmax.f32 %v611, %v612
  %v614 = vrot.slane %v613, 1
  %v615 = vmax.f32 %v613, %v614
  %v616 = vsub.f32 %v606, %v615
  %v617 = vmul.f32 %v616, 1.442695
  %v618 = vpow.pop %v617
  %v619 = vsel %vm427, %v618, 0.0
  %v620 = vrot.slane %v619, 4
  %v621 = vadd.f32 %v619, %v620
  %v622 = vrot.slane %v621, 2
  %v623 = vadd.f32 %v621, %v622
  %v624 = vrot.slane %v623, 1
  %v625 = vadd.f32 %v623, %v624
  %v626 = vrcp.pop %v625
  %v627 = vmul.f32 %v618, %v626
  %vm628 = vcmask 31744
  %v630 = vsel %vm628, %v521, 0
  %v633 = vsel %vm628, %v526, 0
  %v636 = vsel %vm628, %v531, 0
  %v639 = vsel %vm628, %v536, 0
  %vm641 = vcmask 1043456
  %v643 = vsel %vm641, %v627, 0
  %645 = vmatprep.subr.mxu0 0.0
  %646 = vmatpush1.msra.mxu0 0.0
  %647 = vmatprep.subr.mxu0 0.0
  %648 = vmatpush1.msra.mxu0 0.0
  %649 = vmatprep.subr.mxu0 0.0
  %650 = vmatpush1.msra.mxu0 0.0
  %651 = vmatprep.subr.mxu0 0.0
  %652 = vmatpush1.msra.mxu0 0.0
  %653 = vmatprep.subr.mxu0 0.0
  %654 = vmatpush1.msra.mxu0 0.0
  %655 = vmatprep.subr.mxu0 0.0
  %656 = vmatpush1.msra.mxu0 0.0
  %657 = vmatprep.subr.mxu0 0.0
  %658 = vmatpush1.msra.mxu0 0.0
  %659 = vmatprep.subr.mxu0 0.0
  %660 = vmatpush1.msra.mxu0 0.0
  %661 = vmatprep.subr.mxu0 0.0
  %662 = vmatpush1.msra.mxu0 0.0
  %663 = vmatprep.subr.mxu0 0.0
  %664 = vmatpush1.msra.mxu0 0.0
  %665 = vmatprep.subr.mxu0 0.0
  %666 = vmatpush1.msra.mxu0 0.0
  %667 = vmatprep.subr.mxu0 0.0
  %668 = vmatpush1.msra.mxu0 0.0
  %669 = vmatprep.subr.mxu0 0.0
  %670 = vmatpush1.msra.mxu0 0.0
  %671 = vmatprep.subr.mxu0 0.0
  %672 = vmatpush1.msra.mxu0 0.0
  %673 = vmatprep.subr.mxu0 0.0
  %674 = vmatpush1.msra.mxu0 0.0
  %675 = vmatprep.subr.mxu0 0.0
  %676 = vmatpush1.msra.mxu0 %v643
  %677 = vmatprep.subr.mxu0 0.0
  %678 = vmatpush2.msra.mxu0 0.0
  %679 = vmatprep.subr.mxu0 0.0
  %680 = vmatpush2.msra.mxu0 0.0
  %681 = vmatprep.subr.mxu0 0.0
  %682 = vmatpush2.msra.mxu0 0.0
  %683 = vmatprep.subr.mxu0 0.0
  %684 = vmatpush2.msra.mxu0 0.0
  %685 = vmatprep.subr.mxu0 0.0
  %686 = vmatpush2.msra.mxu0 0.0
  %687 = vmatprep.subr.mxu0 0.0
  %688 = vmatpush2.msra.mxu0 0.0
  %689 = vmatprep.subr.mxu0 0.0
  %690 = vmatpush2.msra.mxu0 0.0
  %691 = vmatprep.subr.mxu0 0.0
  %692 = vmatpush2.msra.mxu0 0.0
  %693 = vmatprep.subr.mxu0 0.0
  %694 = vmatpush2.msra.mxu0 0.0
  %695 = vmatprep.subr.mxu0 0.0
  %696 = vmatpush2.msra.mxu0 0.0
  %697 = vmatprep.subr.mxu0 0.0
  %698 = vmatpush2.msra.mxu0 0.0
  %699 = vmatprep.subr.mxu0 0.0
  %700 = vmatpush2.msra.mxu0 0.0
  %701 = vmatprep.subr.mxu0 0.0
  %702 = vmatpush2.msra.mxu0 0.0
  %703 = vmatprep.subr.mxu0 0.0
  %704 = vmatpush2.msra.mxu0 0.0
  %705 = vmatprep.subr.mxu0 0.0
  %706 = vmatpush2.msra.mxu0 0.0
  %707 = vmatprep.subr.mxu0 0.0
  %708 = vmatpush2.msra.mxu0 0.0
  %709 = vmatprep.mubr.f32.mxu0 0.0
  %710 = vmatmul.mubr.f32.gmra.mxu0 %v630
  %v711 = vpop.f32.mrf.mxu0
  %v712 = vadd.f32 0.0, %v711
  %v713 = vpop.f32.mrf.mxu0
  %714 = vmatprep.mubr.f32.mxu0 0.0
  %715 = vmatmul.mubr.f32.gmra.mxu0 %v633
  %v716 = vpop.f32.mrf.mxu0
  %v717 = vadd.f32 0.0, %v716
  %v718 = vpop.f32.mrf.mxu0
  %719 = vmatprep.mubr.f32.mxu0 0.0
  %720 = vmatmul.mubr.f32.gmra.mxu0 %v636
  %v721 = vpop.f32.mrf.mxu0
  %v722 = vadd.f32 0.0, %v721
  %v723 = vpop.f32.mrf.mxu0
  %724 = vmatprep.mubr.f32.mxu0 0.0
  %725 = vmatmul.mubr.f32.gmra.mxu0 %v639
  %v726 = vpop.f32.mrf.mxu0
  %v727 = vadd.f32 0.0, %v726
  %v728 = vpop.f32.mrf.mxu0
  %729 = vdwg.mxu0
  %730 = vst.msk [vmem:[%s4] sm:$0xff] %vm268, %v712
  %731 = vst.msk [vmem:[%s4 + $0x8] sm:$0xff] %vm268, %v717
  %732 = vst.msk [vmem:[%s4 + $0x10] sm:$0xff] %vm268, %v722
  %733 = vst.msk [vmem:[%s4 + $0x18] sm:$0xff] %vm268, %v727
  %s734 = scalar_lea.vmem %s0, 32
  %v735 = vld [vmem:[%s734] sm:$0xff]
  %v736 = vld [vmem:[%s734 + $0x8] sm:$0xff]
  %v737 = vld [vmem:[%s734 + $0x10] sm:$0xff]
  %v738 = vld [vmem:[%s734 + $0x18] sm:$0xff]
  %739 = vmatprep.subr.mxu0 0.0
  %740 = vmatpush1.msra.mxu0 0.0
  %741 = vmatprep.subr.mxu0 0.0
  %742 = vmatpush1.msra.mxu0 0.0
  %743 = vmatprep.subr.mxu0 0.0
  %744 = vmatpush1.msra.mxu0 0.0
  %745 = vmatprep.subr.mxu0 0.0
  %746 = vmatpush1.msra.mxu0 0.0
  %747 = vmatprep.subr.mxu0 0.0
  %748 = vmatpush1.msra.mxu0 0.0
  %749 = vmatprep.subr.mxu0 0.0
  %750 = vmatpush1.msra.mxu0 0.0
  %751 = vmatprep.subr.mxu0 0.0
  %752 = vmatpush1.msra.mxu0 0.0
  %753 = vmatprep.subr.mxu0 0.0
  %754 = vmatpush1.msra.mxu0 0.0
  %755 = vmatprep.subr.mxu0 0.0
  %756 = vmatpush1.msra.mxu0 0.0
  %757 = vmatprep.subr.mxu0 0.0
  %758 = vmatpush1.msra.mxu0 0.0
  %759 = vmatprep.subr.mxu0 0.0
  %760 = vmatpush1.msra.mxu0 0.0
  %761 = vmatprep.subr.mxu0 0.0
  %762 = vmatpush1.msra.mxu0 0.0
  %763 = vmatprep.subr.mxu0 0.0
  %764 = vmatpush1.msra.mxu0 %v738
  %765 = vmatprep.subr.mxu0 0.0
  %766 = vmatpush1.msra.mxu0 %v737
  %767 = vmatprep.subr.mxu0 0.0
  %768 = vmatpush1.msra.mxu0 %v736
  %769 = vmatprep.subr.mxu0 0.0
  %770 = vmatpush1.msra.mxu0 %v735
  %771 = vmatprep.subr.mxu0 0.0
  %772 = vmatpush2.msra.mxu0 0.0
  %773 = vmatprep.subr.mxu0 0.0
  %774 = vmatpush2.msra.mxu0 0.0
  %775 = vmatprep.subr.mxu0 0.0
  %776 = vmatpush2.msra.mxu0 0.0
  %777 = vmatprep.subr.mxu0 0.0
  %778 = vmatpush2.msra.mxu0 0.0
  %779 = vmatprep.subr.mxu0 0.0
  %780 = vmatpush2.msra.mxu0 0.0
  %781 = vmatprep.subr.mxu0 0.0
  %782 = vmatpush2.msra.mxu0 0.0
  %783 = vmatprep.subr.mxu0 0.0
  %784 = vmatpush2.msra.mxu0 0.0
  %785 = vmatprep.subr.mxu0 0.0
  %786 = vmatpush2.msra.mxu0 0.0
  %787 = vmatprep.subr.mxu0 0.0
  %788 = vmatpush2.msra.mxu0 0.0
  %789 = vmatprep.subr.mxu0 0.0
  %790 = vmatpush2.msra.mxu0 0.0
  %791 = vmatprep.subr.mxu0 0.0
  %792 = vmatpush2.msra.mxu0 0.0
  %793 = vmatprep.subr.mxu0 0.0
  %794 = vmatpush2.msra.mxu0 0.0
  %795 = vmatprep.subr.mxu0 0.0
  %796 = vmatpush2.msra.mxu0 0.0
  %797 = vmatprep.subr.mxu0 0.0
  %798 = vmatpush2.msra.mxu0 0.0
  %799 = vmatprep.subr.mxu0 0.0
  %800 = vmatpush2.msra.mxu0 0.0
  %801 = vmatprep.subr.mxu0 0.0
  %802 = vmatpush2.msra.mxu0 0.0
  %803 = vmatprep.mubr.f32.mxu0 0.0
  %804 = vmatmul.mubr.f32.gmra.mxu0 %v108
  %v805 = vpop.f32.mrf.mxu0
  %v806 = vadd.f32 %v49, %v805
  %v807 = vpop.f32.mrf.mxu0
  %808 = vmatprep.mubr.f32.mxu0 0.0
  %809 = vmatmul.mubr.f32.gmra.mxu0 %v111
  %v810 = vpop.f32.mrf.mxu0
  %v811 = vadd.f32 %v54, %v810
  %v812 = vpop.f32.mrf.mxu0
  %813 = vmatprep.mubr.f32.mxu0 0.0
  %814 = vmatmul.mubr.f32.gmra.mxu0 %v114
  %v815 = vpop.f32.mrf.mxu0
  %v816 = vadd.f32 %v59, %v815
  %v817 = vpop.f32.mrf.mxu0
  %818 = vmatprep.mubr.f32.mxu0 0.0
  %819 = vmatmul.mubr.f32.gmra.mxu0 %v117
  %v820 = vpop.f32.mrf.mxu0
  %v821 = vadd.f32 %v64, %v820
  %v822 = vpop.f32.mrf.mxu0
  %823 = vmatprep.mubr.f32.mxu0 0.0
  %824 = vmatmul.mubr.f32.gmra.mxu0 %v120
  %v825 = vpop.f32.mrf.mxu0
  %v826 = vadd.f32 %v69, %v825
  %v827 = vpop.f32.mrf.mxu0
  %828 = vmatprep.mubr.f32.mxu0 0.0
  %829 = vmatmul.mubr.f32.gmra.mxu0 %v123
  %v830 = vpop.f32.mrf.mxu0
  %v831 = vadd.f32 %v74, %v830
  %v832 = vpop.f32.mrf.mxu0
  %833 = vmatprep.mubr.f32.mxu0 0.0
  %834 = vmatmul.mubr.f32.gmra.mxu0 %v126
  %v835 = vpop.f32.mrf.mxu0
  %v836 = vadd.f32 %v79, %v835
  %v837 = vpop.f32.mrf.mxu0
  %838 = vmatprep.mubr.f32.mxu0 0.0
  %839 = vmatmul.mubr.f32.gmra.mxu0 %v129
  %v840 = vpop.f32.mrf.mxu0
  %v841 = vadd.f32 %v84, %v840
  %v842 = vpop.f32.mrf.mxu0
  %843 = vmatprep.mubr.f32.mxu0 0.0
  %844 = vmatmul.mubr.f32.gmra.mxu0 %v132
  %v845 = vpop.f32.mrf.mxu0
  %v846 = vadd.f32 %v89, %v845
  %v847 = vpop.f32.mrf.mxu0
  %848 = vmatprep.mubr.f32.mxu0 0.0
  %849 = vmatmul.mubr.f32.gmra.mxu0 %v135
  %v850 = vpop.f32.mrf.mxu0
  %v851 = vadd.f32 %v94, %v850
  %v852 = vpop.f32.mrf.mxu0
  %853 = vmatprep.mubr.f32.mxu0 0.0
  %854 = vmatmul.mubr.f32.gmra.mxu0 %v138
  %v855 = vpop.f32.mrf.mxu0
  %v856 = vadd.f32 %v99, %v855
  %v857 = vpop.f32.mrf.mxu0
  %858 = vmatprep.mubr.f32.mxu0 0.0
  %859 = vmatmul.mubr.f32.gmra.mxu0 %v141
  %v860 = vpop.f32.mrf.mxu0
  %v861 = vadd.f32 %v104, %v860
  %v862 = vpop.f32.mrf.mxu0
  %863 = vdwg.mxu0
  %v865 = vsel %vm268, %v806, 0
  %v868 = vsel %vm268, %v811, 0
  %v871 = vsel %vm268, %v816, 0
  %v874 = vsel %vm268, %v821, 0
  %876 = vmatprep.subr.mxu0 0.0
  %877 = vmatpush1.xpose.msra.mxu0 0.0
  %878 = vmatprep.subr.mxu0 0.0
  %879 = vmatpush1.xpose.msra.mxu0 0.0
  %880 = vmatprep.subr.mxu0 0.0
  %881 = vmatpush1.xpose.msra.mxu0 0.0
  %882 = vmatprep.subr.mxu0 0.0
  %883 = vmatpush1.xpose.msra.mxu0 0.0
  %884 = vmatprep.subr.mxu0 0.0
  %885 = vmatpush1.xpose.msra.mxu0 0.0
  %886 = vmatprep.subr.mxu0 0.0
  %887 = vmatpush1.xpose.msra.mxu0 0.0
  %888 = vmatprep.subr.mxu0 0.0
  %889 = vmatpush1.xpose.msra.mxu0 0.0
  %890 = vmatprep.subr.mxu0 0.0
  %891 = vmatpush1.xpose.msra.mxu0 0.0
  %892 = vmatprep.subr.mxu0 0.0
  %893 = vmatpush1.xpose.msra.mxu0 0.0
  %894 = vmatprep.subr.mxu0 0.0
  %895 = vmatpush1.xpose.msra.mxu0 0.0
  %896 = vmatprep.subr.mxu0 0.0
  %897 = vmatpush1.xpose.msra.mxu0 0.0
  %898 = vmatprep.subr.mxu0 0.0
  %899 = vmatpush1.xpose.msra.mxu0 0.0
  %900 = vmatprep.subr.mxu0 0.0
  %901 = vmatpush1.xpose.msra.mxu0 %v874
  %902 = vmatprep.subr.mxu0 0.0
  %903 = vmatpush1.xpose.msra.mxu0 %v871
  %904 = vmatprep.subr.mxu0 0.0
  %905 = vmatpush1.xpose.msra.mxu0 %v868
  %906 = vmatprep.subr.mxu0 0.0
  %907 = vmatpush1.xpose.msra.mxu0 %v865
  %908 = vmatprep.subr.mxu0 0.0
  %909 = vmatpush2.xpose.msra.mxu0 0.0
  %910 = vmatprep.subr.mxu0 0.0
  %911 = vmatpush2.xpose.msra.mxu0 0.0
  %912 = vmatprep.subr.mxu0 0.0
  %913 = vmatpush2.xpose.msra.mxu0 0.0
  %914 = vmatprep.subr.mxu0 0.0
  %915 = vmatpush2.xpose.msra.mxu0 0.0
  %916 = vmatprep.subr.mxu0 0.0
  %917 = vmatpush2.xpose.msra.mxu0 0.0
  %918 = vmatprep.subr.mxu0 0.0
  %919 = vmatpush2.xpose.msra.mxu0 0.0
  %920 = vmatprep.subr.mxu0 0.0
  %921 = vmatpush2.xpose.msra.mxu0 0.0
  %922 = vmatprep.subr.mxu0 0.0
  %923 = vmatpush2.xpose.msra.mxu0 0.0
  %924 = vmatprep.subr.mxu0 0.0
  %925 = vmatpush2.xpose.msra.mxu0 0.0
  %926 = vmatprep.subr.mxu0 0.0
  %927 = vmatpush2.xpose.msra.mxu0 0.0
  %928 = vmatprep.subr.mxu0 0.0
  %929 = vmatpush2.xpose.msra.mxu0 0.0
  %930 = vmatprep.subr.mxu0 0.0
  %931 = vmatpush2.xpose.msra.mxu0 0.0
  %932 = vmatprep.subr.mxu0 0.0
  %933 = vmatpush2.xpose.msra.mxu0 0.0
  %934 = vmatprep.subr.mxu0 0.0
  %935 = vmatpush2.xpose.msra.mxu0 0.0
  %936 = vmatprep.subr.mxu0 0.0
  %937 = vmatpush2.xpose.msra.mxu0 0.0
  %938 = vmatprep.subr.mxu0 0.0
  %939 = vmatpush2.xpose.msra.mxu0 0.0
  %940 = vmatprep.mubr.f32.mxu0 0.0
  %941 = vmatmul.mubr.f32.gmra.mxu0 %v270
  %v942 = vpop.f32.mrf.mxu0
  %v943 = vadd.f32 0.0, %v942
  %v944 = vpop.f32.mrf.mxu0
  %945 = vdwg.mxu0
  %v947 = vsel %vm106, %v943, 0
  %949 = vmatprep.subr.mxu0 0.0
  %950 = vmatpush1.msra.mxu0 0.0
  %951 = vmatprep.subr.mxu0 0.0
  %952 = vmatpush1.msra.mxu0 0.0
  %953 = vmatprep.subr.mxu0 0.0
  %954 = vmatpush1.msra.mxu0 0.0
  %955 = vmatprep.subr.mxu0 0.0
  %956 = vmatpush1.msra.mxu0 0.0
  %957 = vmatprep.subr.mxu0 0.0
  %958 = vmatpush1.msra.mxu0 0.0
  %959 = vmatprep.subr.mxu0 0.0
  %960 = vmatpush1.msra.mxu0 0.0
  %961 = vmatprep.subr.mxu0 0.0
  %962 = vmatpush1.msra.mxu0 0.0
  %963 = vmatprep.subr.mxu0 0.0
  %964 = vmatpush1.msra.mxu0 0.0
  %965 = vmatprep.subr.mxu0 0.0
  %966 = vmatpush1.msra.mxu0 0.0
  %967 = vmatprep.subr.mxu0 0.0
  %968 = vmatpush1.msra.mxu0 0.0
  %969 = vmatprep.subr.mxu0 0.0
  %970 = vmatpush1.msra.mxu0 0.0
  %971 = vmatprep.subr.mxu0 0.0
  %972 = vmatpush1.msra.mxu0 0.0
  %973 = vmatprep.subr.mxu0 0.0
  %974 = vmatpush1.msra.mxu0 %v841
  %975 = vmatprep.subr.mxu0 0.0
  %976 = vmatpush1.msra.mxu0 %v836
  %977 = vmatprep.subr.mxu0 0.0
  %978 = vmatpush1.msra.mxu0 %v831
  %979 = vmatprep.subr.mxu0 0.0
  %980 = vmatpush1.msra.mxu0 %v826
  %981 = vmatprep.subr.mxu0 0.0
  %982 = vmatpush2.msra.mxu0 0.0
  %983 = vmatprep.subr.mxu0 0.0
  %984 = vmatpush2.msra.mxu0 0.0
  %985 = vmatprep.subr.mxu0 0.0
  %986 = vmatpush2.msra.mxu0 0.0
  %987 = vmatprep.subr.mxu0 0.0
  %988 = vmatpush2.msra.mxu0 0.0
  %989 = vmatprep.subr.mxu0 0.0
  %990 = vmatpush2.msra.mxu0 0.0
  %991 = vmatprep.subr.mxu0 0.0
  %992 = vmatpush2.msra.mxu0 0.0
  %993 = vmatprep.subr.mxu0 0.0
  %994 = vmatpush2.msra.mxu0 0.0
  %995 = vmatprep.subr.mxu0 0.0
  %996 = vmatpush2.msra.mxu0 0.0
  %997 = vmatprep.subr.mxu0 0.0
  %998 = vmatpush2.msra.mxu0 0.0
  %999 = vmatprep.subr.mxu0 0.0
  %1000 = vmatpush2.msra.mxu0 0.0
  %1001 = vmatprep.subr.mxu0 0.0
  %1002 = vmatpush2.msra.mxu0 0.0
  %1003 = vmatprep.subr.mxu0 0.0
  %1004 = vmatpush2.msra.mxu0 0.0
  %1005 = vmatprep.subr.mxu0 0.0
  %1006 = vmatpush2.msra.mxu0 0.0
  %1007 = vmatprep.subr.mxu0 0.0
  %1008 = vmatpush2.msra.mxu0 0.0
  %1009 = vmatprep.subr.mxu0 0.0
  %1010 = vmatpush2.msra.mxu0 0.0
  %1011 = vmatprep.subr.mxu0 0.0
  %1012 = vmatpush2.msra.mxu0 0.0
  %1013 = vmatprep.mubr.f32.mxu0 0.0
  %1014 = vmatmul.mubr.f32.gmra.mxu0 %v947
  %v1015 = vpop.f32.mrf.mxu0
  %v1016 = vadd.f32 0.0, %v1015
  %v1017 = vpop.f32.mrf.mxu0
  %1018 = vdwg.mxu0
  %v1019 = vsel %vm427, %v1016, -inf
  %1020 = vmax.xlane.f32.xlu0 %v1019
  %v1021 = vpop.xlane.xlu0 %1020
  %v1022 = vsub.f32 %v1016, %v1021
  %v1023 = vmul.f32 %v1022, 1.442695
  %v1024 = vpow.pop %v1023
  %v1025 = vsel %vm427, %v1024, 0.0
  %1026 = vadd.xlane.f32.xlu0 %v1025
  %v1027 = vpop.xlane.xlu0 %1026
  %v1028 = vrcp.pop %v1027
  %v1029 = vmul.f32 %v1024, %v1028
  %v1031 = vsel %vm268, %v846, 0
  %v1034 = vsel %vm268, %v851, 0
  %v1037 = vsel %vm268, %v856, 0
  %v1040 = vsel %vm268, %v861, 0
  %v1043 = vsel %vm268, %v1029, 0
  %1045 = vmatprep.subr.mxu0 0.0
  %1046 = vmatpush1.xpose.msra.mxu0 0.0
  %1047 = vmatprep.subr.mxu0 0.0
  %1048 = vmatpush1.xpose.msra.mxu0 0.0
  %1049 = vmatprep.subr.mxu0 0.0
  %1050 = vmatpush1.xpose.msra.mxu0 0.0
  %1051 = vmatprep.subr.mxu0 0.0
  %1052 = vmatpush1.xpose.msra.mxu0 0.0
  %1053 = vmatprep.subr.mxu0 0.0
  %1054 = vmatpush1.xpose.msra.mxu0 0.0
  %1055 = vmatprep.subr.mxu0 0.0
  %1056 = vmatpush1.xpose.msra.mxu0 0.0
  %1057 = vmatprep.subr.mxu0 0.0
  %1058 = vmatpush1.xpose.msra.mxu0 0.0
  %1059 = vmatprep.subr.mxu0 0.0
  %1060 = vmatpush1.xpose.msra.mxu0 0.0
  %1061 = vmatprep.subr.mxu0 0.0
  %1062 = vmatpush1.xpose.msra.mxu0 0.0
  %1063 = vmatprep.subr.mxu0 0.0
  %1064 = vmatpush1.xpose.msra.mxu0 0.0
  %1065 = vmatprep.subr.mxu0 0.0
  %1066 = vmatpush1.xpose.msra.mxu0 0.0
  %1067 = vmatprep.subr.mxu0 0.0
  %1068 = vmatpush1.xpose.msra.mxu0 0.0
  %1069 = vmatprep.subr.mxu0 0.0
  %1070 = vmatpush1.xpose.msra.mxu0 0.0
  %1071 = vmatprep.subr.mxu0 0.0
  %1072 = vmatpush1.xpose.msra.mxu0 0.0
  %1073 = vmatprep.subr.mxu0 0.0
  %1074 = vmatpush1.xpose.msra.mxu0 0.0
  %1075 = vmatprep.subr.mxu0 0.0
  %1076 = vmatpush1.xpose.msra.mxu0 %v1043
  %1077 = vmatprep.subr.mxu0 0.0
  %1078 = vmatpush2.xpose.msra.mxu0 0.0
  %1079 = vmatprep.subr.mxu0 0.0
  %1080 = vmatpush2.xpose.msra.mxu0 0.0
  %1081 = vmatprep.subr.mxu0 0.0
  %1082 = vmatpush2.xpose.msra.mxu0 0.0
  %1083 = vmatprep.subr.mxu0 0.0
  %1084 = vmatpush2.xpose.msra.mxu0 0.0
  %1085 = vmatprep.subr.mxu0 0.0
  %1086 = vmatpush2.xpose.msra.mxu0 0.0
  %1087 = vmatprep.subr.mxu0 0.0
  %1088 = vmatpush2.xpose.msra.mxu0 0.0
  %1089 = vmatprep.subr.mxu0 0.0
  %1090 = vmatpush2.xpose.msra.mxu0 0.0
  %1091 = vmatprep.subr.mxu0 0.0
  %1092 = vmatpush2.xpose.msra.mxu0 0.0
  %1093 = vmatprep.subr.mxu0 0.0
  %1094 = vmatpush2.xpose.msra.mxu0 0.0
  %1095 = vmatprep.subr.mxu0 0.0
  %1096 = vmatpush2.xpose.msra.mxu0 0.0
  %1097 = vmatprep.subr.mxu0 0.0
  %1098 = vmatpush2.xpose.msra.mxu0 0.0
  %1099 = vmatprep.subr.mxu0 0.0
  %1100 = vmatpush2.xpose.msra.mxu0 0.0
  %1101 = vmatprep.subr.mxu0 0.0
  %1102 = vmatpush2.xpose.msra.mxu0 0.0
  %1103 = vmatprep.subr.mxu0 0.0
  %1104 = vmatpush2.xpose.msra.mxu0 0.0
  %1105 = vmatprep.subr.mxu0 0.0
  %1106 = vmatpush2.xpose.msra.mxu0 0.0
  %1107 = vmatprep.subr.mxu0 0.0
  %1108 = vmatpush2.xpose.msra.mxu0 0.0
  %1109 = vmatprep.mubr.f32.mxu0 0.0
  %1110 = vmatmul.mubr.f32.gmra.mxu0 %v1031
  %v1111 = vpop.f32.mrf.mxu0
  %v1112 = vadd.f32 0.0, %v1111
  %v1113 = vpop.f32.mrf.mxu0
  %1114 = vmatprep.mubr.f32.mxu0 0.0
  %1115 = vmatmul.mubr.f32.gmra.mxu0 %v1034
  %v1116 = vpop.f32.mrf.mxu0
  %v1117 = vadd.f32 0.0, %v1116
  %v1118 = vpop.f32.mrf.mxu0
  %1119 = vmatprep.mubr.f32.mxu0 0.0
  %1120 = vmatmul.mubr.f32.gmra.mxu0 %v1037
  %v1121 = vpop.f32.mrf.mxu0
  %v1122 = vadd.f32 0.0, %v1121
  %v1123 = vpop.f32.mrf.mxu0
  %1124 = vmatprep.mubr.f32.mxu0 0.0
  %1125 = vmatmul.mubr.f32.gmra.mxu0 %v1040
  %v1126 = vpop.f32.mrf.mxu0
  %v1127 = vadd.f32 0.0, %v1126
  %v1128 = vpop.f32.mrf.mxu0
  %1129 = vdwg.mxu0
  %1130 = vmatprep.subr.mxu0 0.0
  %1131 = vmatpush1.msra.mxu0 0.0
  %1132 = vmatprep.subr.mxu0 0.0
  %1133 = vmatpush1.msra.mxu0 0.0
  %1134 = vmatprep.subr.mxu0 0.0
  %1135 = vmatpush1.msra.mxu0 0.0
  %1136 = vmatprep.subr.mxu0 0.0
  %1137 = vmatpush1.msra.mxu0 0.0
  %1138 = vmatprep.subr.mxu0 0.0
  %1139 = vmatpush1.msra.mxu0 0.0
  %1140 = vmatprep.subr.mxu0 0.0
  %1141 = vmatpush1.msra.mxu0 0.0
  %1142 = vmatprep.subr.mxu0 0.0
  %1143 = vmatpush1.msra.mxu0 0.0
  %1144 = vmatprep.subr.mxu0 0.0
  %1145 = vmatpush1.msra.mxu0 0.0
  %1146 = vmatprep.subr.mxu0 0.0
  %1147 = vmatpush1.msra.mxu0 0.0
  %1148 = vmatprep.subr.mxu0 0.0
  %1149 = vmatpush1.msra.mxu0 0.0
  %1150 = vmatprep.subr.mxu0 0.0
  %1151 = vmatpush1.msra.mxu0 0.0
  %1152 = vmatprep.subr.mxu0 0.0
  %1153 = vmatpush1.msra.mxu0 0.0
  %1154 = vmatprep.subr.mxu0 0.0
  %1155 = vmatpush1.msra.mxu0 %v821
  %1156 = vmatprep.subr.mxu0 0.0
  %1157 = vmatpush1.msra.mxu0 %v816
  %1158 = vmatprep.subr.mxu0 0.0
  %1159 = vmatpush1.msra.mxu0 %v811
  %1160 = vmatprep.subr.mxu0 0.0
  %1161 = vmatpush1.msra.mxu0 %v806
  %1162 = vmatprep.subr.mxu0 0.0
  %1163 = vmatpush2.msra.mxu0 0.0
  %1164 = vmatprep.subr.mxu0 0.0
  %1165 = vmatpush2.msra.mxu0 0.0
  %1166 = vmatprep.subr.mxu0 0.0
  %1167 = vmatpush2.msra.mxu0 0.0
  %1168 = vmatprep.subr.mxu0 0.0
  %1169 = vmatpush2.msra.mxu0 0.0
  %1170 = vmatprep.subr.mxu0 0.0
  %1171 = vmatpush2.msra.mxu0 0.0
  %1172 = vmatprep.subr.mxu0 0.0
  %1173 = vmatpush2.msra.mxu0 0.0
  %1174 = vmatprep.subr.mxu0 0.0
  %1175 = vmatpush2.msra.mxu0 0.0
  %1176 = vmatprep.subr.mxu0 0.0
  %1177 = vmatpush2.msra.mxu0 0.0
  %1178 = vmatprep.subr.mxu0 0.0
  %1179 = vmatpush2.msra.mxu0 0.0
  %1180 = vmatprep.subr.mxu0 0.0
  %1181 = vmatpush2.msra.mxu0 0.0
  %1182 = vmatprep.subr.mxu0 0.0
  %1183 = vmatpush2.msra.mxu0 0.0
  %1184 = vmatprep.subr.mxu0 0.0
  %1185 = vmatpush2.msra.mxu0 0.0
  %1186 = vmatprep.subr.mxu0 0.0
  %1187 = vmatpush2.msra.mxu0 0.0
  %1188 = vmatprep.subr.mxu0 0.0
  %1189 = vmatpush2.msra.mxu0 0.0
  %1190 = vmatprep.subr.mxu0 0.0
  %1191 = vmatpush2.msra.mxu0 0.0
  %1192 = vmatprep.subr.mxu0 0.0
  %1193 = vmatpush2.msra.mxu0 0.0
  %1194 = vmatprep.mubr.f32.mxu0 0.0
  %1195 = vmatmul.mubr.f32.gmra.mxu0 %v947
  %v1196 = vpop.f32.mrf.mxu0
  %v1197 = vadd.f32 0.0, %v1196
  %v1198 = vpop.f32.mrf.mxu0
  %1199 = vdwg.mxu0
  %v1200 = vsel %vm427, %v1197, -inf
  %v1201 = vrot.slane %v1200, 4
  %v1202 = vmax.f32 %v1200, %v1201
  %v1203 = vrot.slane %v1202, 2
  %v1204 = vmax.f32 %v1202, %v1203
  %v1205 = vrot.slane %v1204, 1
  %v1206 = vmax.f32 %v1204, %v1205
  %v1207 = vsub.f32 %v1197, %v1206
  %v1208 = vmul.f32 %v1207, 1.442695
  %v1209 = vpow.pop %v1208
  %v1210 = vsel %vm427, %v1209, 0.0
  %v1211 = vrot.slane %v1210, 4
  %v1212 = vadd.f32 %v1210, %v1211
  %v1213 = vrot.slane %v1212, 2
  %v1214 = vadd.f32 %v1212, %v1213
  %v1215 = vrot.slane %v1214, 1
  %v1216 = vadd.f32 %v1214, %v1215
  %v1217 = vrcp.pop %v1216
  %v1218 = vmul.f32 %v1209, %v1217
  %v1220 = vsel %vm628, %v1112, 0
  %v1223 = vsel %vm628, %v1117, 0
  %v1226 = vsel %vm628, %v1122, 0
  %v1229 = vsel %vm628, %v1127, 0
  %v1232 = vsel %vm641, %v1218, 0
  %1234 = vmatprep.subr.mxu0 0.0
  %1235 = vmatpush1.msra.mxu0 0.0
  %1236 = vmatprep.subr.mxu0 0.0
  %1237 = vmatpush1.msra.mxu0 0.0
  %1238 = vmatprep.subr.mxu0 0.0
  %1239 = vmatpush1.msra.mxu0 0.0
  %1240 = vmatprep.subr.mxu0 0.0
  %1241 = vmatpush1.msra.mxu0 0.0
  %1242 = vmatprep.subr.mxu0 0.0
  %1243 = vmatpush1.msra.mxu0 0.0
  %1244 = vmatprep.subr.mxu0 0.0
  %1245 = vmatpush1.msra.mxu0 0.0
  %1246 = vmatprep.subr.mxu0 0.0
  %1247 = vmatpush1.msra.mxu0 0.0
  %1248 = vmatprep.subr.mxu0 0.0
  %1249 = vmatpush1.msra.mxu0 0.0
  %1250 = vmatprep.subr.mxu0 0.0
  %1251 = vmatpush1.msra.mxu0 0.0
  %1252 = vmatprep.subr.mxu0 0.0
  %1253 = vmatpush1.msra.mxu0 0.0
  %1254 = vmatprep.subr.mxu0 0.0
  %1255 = vmatpush1.msra.mxu0 0.0
  %1256 = vmatprep.subr.mxu0 0.0
  %1257 = vmatpush1.msra.mxu0 0.0
  %1258 = vmatprep.subr.mxu0 0.0
  %1259 = vmatpush1.msra.mxu0 0.0
  %1260 = vmatprep.subr.mxu0 0.0
  %1261 = vmatpush1.msra.mxu0 0.0
  %1262 = vmatprep.subr.mxu0 0.0
  %1263 = vmatpush1.msra.mxu0 0.0
  %1264 = vmatprep.subr.mxu0 0.0
  %1265 = vmatpush1.msra.mxu0 %v1232
  %1266 = vmatprep.subr.mxu0 0.0
  %1267 = vmatpush2.msra.mxu0 0.0
  %1268 = vmatprep.subr.mxu0 0.0
  %1269 = vmatpush2.msra.mxu0 0.0
  %1270 = vmatprep.subr.mxu0 0.0
  %1271 = vmatpush2.msra.mxu0 0.0
  %1272 = vmatprep.subr.mxu0 0.0
  %1273 = vmatpush2.msra.mxu0 0.0
  %1274 = vmatprep.subr.mxu0 0.0
  %1275 = vmatpush2.msra.mxu0 0.0
  %1276 = vmatprep.subr.mxu0 0.0
  %1277 = vmatpush2.msra.mxu0 0.0
  %1278 = vmatprep.subr.mxu0 0.0
  %1279 = vmatpush2.msra.mxu0 0.0
  %1280 = vmatprep.subr.mxu0 0.0
  %1281 = vmatpush2.msra.mxu0 0.0
  %1282 = vmatprep.subr.mxu0 0.0
  %1283 = vmatpush2.msra.mxu0 0.0
  %1284 = vmatprep.subr.mxu0 0.0
  %1285 = vmatpush2.msra.mxu0 0.0
  %1286 = vmatprep.subr.mxu0 0.0
  %1287 = vmatpush2.msra.mxu0 0.0
  %1288 = vmatprep.subr.mxu0 0.0
  %1289 = vmatpush2.msra.mxu0 0.0
  %1290 = vmatprep.subr.mxu0 0.0
  %1291 = vmatpush2.msra.mxu0 0.0
  %1292 = vmatprep.subr.mxu0 0.0
  %1293 = vmatpush2.msra.mxu0 0.0
  %1294 = vmatprep.subr.mxu0 0.0
  %1295 = vmatpush2.msra.mxu0 0.0
  %1296 = vmatprep.subr.mxu0 0.0
  %1297 = vmatpush2.msra.mxu0 0.0
  %1298 = vmatprep.mubr.f32.mxu0 0.0
  %1299 = vmatmul.mubr.f32.gmra.mxu0 %v1220
  %v1300 = vpop.f32.mrf.mxu0
  %v1301 = vadd.f32 0.0, %v1300
  %v1302 = vpop.f32.mrf.mxu0
  %1303 = vmatprep.mubr.f32.mxu0 0.0
  %1304 = vmatmul.mubr.f32.gmra.mxu0 %v1223
  %v1305 = vpop.f32.mrf.mxu0
  %v1306 = vadd.f32 0.0, %v1305
  %v1307 = vpop.f32.mrf.mxu0
  %1308 = vmatprep.mubr.f32.mxu0 0.0
  %1309 = vmatmul.mubr.f32.gmra.mxu0 %v1226
  %v1310 = vpop.f32.mrf.mxu0
  %v1311 = vadd.f32 0.0, %v1310
  %v1312 = vpop.f32.mrf.mxu0
  %1313 = vmatprep.mubr.f32.mxu0 0.0
  %1314 = vmatmul.mubr.f32.gmra.mxu0 %v1229
  %v1315 = vpop.f32.mrf.mxu0
  %v1316 = vadd.f32 0.0, %v1315
  %v1317 = vpop.f32.mrf.mxu0
  %1318 = vdwg.mxu0
  %s1319 = scalar_lea.vmem %s4, 32
  %1320 = vst.msk [vmem:[%s1319] sm:$0xff] %vm268, %v1301
  %1321 = vst.msk [vmem:[%s1319 + $0x8] sm:$0xff] %vm268, %v1306
  %1322 = vst.msk [vmem:[%s1319 + $0x10] sm:$0xff] %vm268, %v1311
  %1323 = vst.msk [vmem:[%s1319 + $0x18] sm:$0xff] %vm268, %v1316
  // Predicated region
  $region18: #{tpu_custom_call.1} parent=0 // pred_check
    _
  $region19: #{tpu_custom_call.1} parent=0 // pred_check_branch
    %1325 = sbr.rel (0) target = $region21
  $region20: #{tpu_custom_call.1} parent=0 // pred_region
    _
  $region21: #{tpu_custom_call.1} parent=0 // pred_fallthru
    _
  // Predicated region
  $region22: #{tpu_custom_call.1} parent=0 // pred_check
    _
  $region23: #{tpu_custom_call.1} parent=0 // pred_check_branch
    %1327 = sbr.rel (0) target = $region25
  $region24: #{tpu_custom_call.1} parent=0 // pred_region
    _
  $region25: #{tpu_custom_call.1} parent=0 // pred_fallthru
    _

</llo_original>
